<compile_context>
chip_gen: v7x
topology: tpu7x:2x2x1
jax: 0.10.0
libtpu: 0.0.40
codegen_flags: <defaults>
</compile_context>

<pallas_src>
import numpy as np
import jax
import jax.numpy as jnp
from jax.experimental import pallas as pl
from jax.experimental.pallas import tpu as pltpu

# ----- model dims (small, consistent with the module) -----
B  = 2    # real batch
BP = 8    # padded batch (one sublane tile)
I  = 1    # input_size (scalar velocity)
E  = 32   # enc_hidden_size
Dd = 32   # dec_hidden_size (attention energy dim)
H  = 32   # dec_hidden_size (LSTM hidden);   4*H = 128 = one vreg lane width
S  = 8    # encoder sequence length
O  = 1    # output_size
L  = 2    # num_layers
OW = 4 * H + 8   # packed per-step output width: [h1 | h0 | c0 | c1 | pred(8 lanes)]


def decoder_step_kernel(x_ref, init_ref, enc_ref, w_small_ref, w_lstm_ref,
                        out_ref, state_ref, eproj_ref):
    """One decode step per grid index t; weights/enc stay VMEM-resident, state carried in scratch."""
    f32 = jnp.float32
    t = pl.program_id(0)

    # ---- one-time init: carried state + decode-invariant encoder projection ----
    @pl.when(t == 0)
    def _init():
        # state slab rows: [dec | h_l0 | h_l1 | c_l0 | c_l1], each (BP, 32); pad rows are zero.
        state_ref[...] = init_ref[...]
        enc = enc_ref[...]                                                    # (S, BP, E)
        eproj_ref[...] = jnp.dot(enc.reshape(S * BP, E), w_small_ref[32:64, :],
                                 preferred_element_type=f32).reshape(S, BP, Dd)

    # ---- packed "small" weights (width 32) ----
    wa_dec = w_small_ref[0:32, :]             # (Dd, Dd)  (pre-transposed)
    ab_blk = w_small_ref[64:72, :]            # rows: 0=ba, 1=v
    ba     = ab_blk[0:1, :]                   # (1, Dd)
    v_row  = ab_blk[1:2, :]                   # (1, Dd)
    fc_blk = w_small_ref[72:80, :]            # rows: 0=wfc, 1=wfo, 2=[wf_x, bf, 0...]
    wfc    = fc_blk[0:1, :]                   # (1, E)
    wfo    = fc_blk[1:2, :]                   # (1, H)
    wfx    = fc_blk[2:3, 0:1]                 # (1, 1)
    bf     = fc_blk[2:3, 1:2]                 # (1, 1)

    # ---- current step activations / carried state ----
    x    = x_ref[0]                           # (BP, I)
    dec  = state_ref[0 * BP:1 * BP, :]        # (BP, Dd)  attention query
    h0_0 = state_ref[1 * BP:2 * BP, :]
    h0_1 = state_ref[2 * BP:3 * BP, :]
    c0_0 = state_ref[3 * BP:4 * BP, :]
    c0_1 = state_ref[4 * BP:5 * BP, :]

    # ---- attention (Bahdanau additive), vectorized over batch; enc in native (S,BP,E) ----
    h_proj = jnp.dot(dec, wa_dec, preferred_element_type=f32) + ba            # (BP, Dd)
    energy = jnp.tanh(eproj_ref[...] + h_proj[None, :, :])                    # (S, BP, Dd)
    scores = jnp.sum(energy * v_row, axis=-1, keepdims=True)                  # (S, BP, 1)  VPU+XLU
    m      = jnp.max(scores, axis=0, keepdims=True)
    p      = jnp.exp(scores - m)
    attn   = p / jnp.sum(p, axis=0, keepdims=True)                            # softmax over S
    wc     = jnp.sum(attn * enc_ref[...], axis=0)                             # (BP, E) context

    # ---- single-step 2-layer LSTM; no lane concat: two K=32 MXU pushes per layer ----
    def gates_to_hc(gates, c_prev):
        i_g = jax.nn.sigmoid(gates[:, 0 * H:1 * H])
        f_g = jax.nn.sigmoid(gates[:, 1 * H:2 * H])
        g_g = jnp.tanh(gates[:, 2 * H:3 * H])
        o_g = jax.nn.sigmoid(gates[:, 3 * H:4 * H])
        c_new = f_g * c_prev + i_g * g_g
        return o_g * jnp.tanh(c_new), c_new

    b0_blk = w_lstm_ref[64:72, :]                    # row 0 = bias0, row 1 = w_ih_l0[:, :I].T
    gates0 = (jnp.dot(wc,   w_lstm_ref[0:32, :],  preferred_element_type=f32)
              + jnp.dot(h0_0, w_lstm_ref[32:64, :], preferred_element_type=f32)
              + x * b0_blk[1:2, :] + b0_blk[0:1, :])                          # (BP, 128)
    h_new0, c_new0 = gates_to_hc(gates0, c0_0)

    gates1 = (jnp.dot(h_new0, w_lstm_ref[72:104, :],  preferred_element_type=f32)
              + jnp.dot(h0_1,   w_lstm_ref[104:136, :], preferred_element_type=f32)
              + w_lstm_ref[136:137, :])                                       # (BP, 128)
    h_new1, c_new1 = gates_to_hc(gates1, c0_1)

    # ---- fc_out on cat(input, weighted_context, outputs): VPU multiply + lane reduce ----
    pred = (jnp.sum(wc * wfc, axis=-1, keepdims=True)
            + jnp.sum(h_new1 * wfo, axis=-1, keepdims=True)
            + x * wfx + bf)                                                   # (BP, 1)

    # ---- carry state for next step (dec query <- outputs; hidden <- new hidden) ----
    state_ref[0 * BP:1 * BP, :] = h_new1
    state_ref[1 * BP:2 * BP, :] = h_new0
    state_ref[2 * BP:3 * BP, :] = h_new1
    state_ref[3 * BP:4 * BP, :] = c_new0
    state_ref[4 * BP:5 * BP, :] = c_new1

    # ---- stream this step's results: four 32-lane stores + one 8-lane store ----
    out_ref[0, :, 0 * H:1 * H] = h_new1
    out_ref[0, :, 1 * H:2 * H] = h_new0
    out_ref[0, :, 2 * H:3 * H] = c_new0
    out_ref[0, :, 3 * H:4 * H] = c_new1
    out_ref[0, :, 4 * H:4 * H + 8] = jnp.broadcast_to(pred, (BP, 8))


# ---------------------------------------------------------------------------
# parameters (PyTorch-layout) and one-time packing
# ---------------------------------------------------------------------------
def make_params(key):
    ks = jax.random.split(key, 13)
    init = lambda k, shape: jax.random.normal(k, shape, jnp.float32) * 0.1
    p = {}
    # attention: Linear(Dd + E -> Dd) ; v: Linear(Dd -> 1, bias=False)
    p["wa"] = init(ks[0], (Dd, Dd + E))          # cat order = (dec_hidden, enc_outputs)
    p["ba"] = init(ks[1], (Dd,))
    p["v"]  = init(ks[2], (1, Dd))
    # LSTM(E + I, H, num_layers=L)
    p["w_ih_l0"] = init(ks[3], (4 * H, I + E))   # cat order = (input, weighted_context)
    p["w_hh_l0"] = init(ks[4], (4 * H, H))
    p["b_ih_l0"] = init(ks[5], (4 * H,))
    p["b_hh_l0"] = init(ks[6], (4 * H,))
    p["w_ih_l1"] = init(ks[7], (4 * H, H))
    p["w_hh_l1"] = init(ks[8], (4 * H, H))
    p["b_ih_l1"] = init(ks[9], (4 * H,))
    p["b_hh_l1"] = init(ks[10], (4 * H,))
    # fc_out: Linear(I + E + H -> O)
    p["wf"] = init(ks[11], (O, I + E + H))       # cat order = (input, weighted_context, outputs)
    p["bf"] = init(ks[12], (O,))
    return p


def pack_weights(params):
    """Hoisted per-parameter-set packing (done ONCE, not per decode step/call)."""
    f32 = jnp.float32
    w_small = jnp.zeros((80, 32), f32)
    w_small = w_small.at[0:32, :].set(params["wa"][:, :Dd].T)          # wa_dec^T
    w_small = w_small.at[32:64, :].set(params["wa"][:, Dd:].T)         # wa_enc^T
    w_small = w_small.at[64, :].set(params["ba"])
    w_small = w_small.at[65, :].set(params["v"][0])
    w_small = w_small.at[72, :].set(params["wf"][0, I:I + E])          # wfc
    w_small = w_small.at[73, :].set(params["wf"][0, I + E:])           # wfo
    w_small = w_small.at[74, 0].set(params["wf"][0, 0])                # wf_x
    w_small = w_small.at[74, 1].set(params["bf"][0])                   # bf

    w_lstm = jnp.zeros((144, 128), f32)
    # layer 0 fused kernel for [wc | h0]:
    w_lstm = w_lstm.at[0:32, :].set(params["w_ih_l0"][:, I:].T)        # wc part
    w_lstm = w_lstm.at[32:64, :].set(params["w_hh_l0"].T)              # h0 part
    w_lstm = w_lstm.at[64, :].set(params["b_ih_l0"] + params["b_hh_l0"])
    w_lstm = w_lstm.at[65, :].set(params["w_ih_l0"][:, 0])             # x column -> row
    # layer 1 fused kernel for [h_prev | h0]:
    w_lstm = w_lstm.at[72:104, :].set(params["w_ih_l1"].T)
    w_lstm = w_lstm.at[104:136, :].set(params["w_hh_l1"].T)
    w_lstm = w_lstm.at[136, :].set(params["b_ih_l1"] + params["b_hh_l1"])
    return {"w_small": w_small, "w_lstm": w_lstm}


# ---------------------------------------------------------------------------
# fused T-step decode (one pallas_call; weights resident, state carried in VMEM)
# ---------------------------------------------------------------------------
def decoder_decode(packed, x_seq, dec_outputs, enc_outputs, hidden):
    """x_seq: (T, B, I) per-step inputs (teacher forcing).  Each step applies Decoder.forward
    with dec_outputs <- previous outputs and hidden <- previous hidden states."""
    f32 = jnp.float32
    T, b = x_seq.shape[0], x_seq.shape[1]
    h0, c0 = hidden

    # One-time (per decode, not per step) padding / packing.
    x_p   = jnp.zeros((T, BP, I), f32).at[:, :b, :].set(x_seq)
    enc_p = jnp.zeros((S, BP, E), f32).at[:, :b, :].set(enc_outputs)
    init = jnp.zeros((5 * BP, 32), f32)
    init = init.at[0 * BP:0 * BP + b, :].set(dec_outputs)
    init = init.at[1 * BP:1 * BP + b, :].set(h0[0])
    init = init.at[2 * BP:2 * BP + b, :].set(h0[1])
    init = init.at[3 * BP:3 * BP + b, :].set(c0[0])
    init = init.at[4 * BP:4 * BP + b, :].set(c0[1])

    out = pl.pallas_call(
        decoder_step_kernel,
        out_shape=jax.ShapeDtypeStruct((T, BP, OW), f32),
        grid_spec=pltpu.PrefetchScalarGridSpec(
            num_scalar_prefetch=0,
            grid=(T,),
            in_specs=[
                pl.BlockSpec((1, BP, I), lambda t: (t, 0, 0)),      # per-step x
                pl.BlockSpec((5 * BP, 32), lambda t: (0, 0)),       # init state slab (resident)
                pl.BlockSpec((S, BP, E), lambda t: (0, 0, 0)),      # enc_outputs (resident)
                pl.BlockSpec((80, 32), lambda t: (0, 0)),           # small weights (resident)
                pl.BlockSpec((144, 128), lambda t: (0, 0)),         # fused LSTM weights (resident)
            ],
            out_specs=pl.BlockSpec((1, BP, OW), lambda t: (t, 0, 0)),   # streamed per step
            scratch_shapes=[pltpu.VMEM((5 * BP, 32), f32),              # carried dec/h/c state
                            pltpu.VMEM((S, BP, Dd), f32)],              # hoisted enc projection
        ),
        compiler_params=pltpu.CompilerParams(dimension_semantics=("arbitrary",)),
    )(x_p, init, enc_p, packed["w_small"], packed["w_lstm"])

    preds   = out[:, :b, 4 * H:4 * H + 1]                           # (T, B, O)
    outputs = out[:, :b, 0:H]                                       # (T, B, H)
    hn = jnp.stack([out[-1, :b, H:2 * H], out[-1, :b, 0:H]], axis=0)
    cn = jnp.stack([out[-1, :b, 2 * H:3 * H], out[-1, :b, 3 * H:4 * H]], axis=0)
    return preds, outputs, (hn, cn)


def decoder_forward(packed, inp, dec_outputs, enc_outputs, hidden):
    """Single-step forward == the original nn.Module semantics (T=1 of the fused kernel)."""
    x = inp.reshape(-1, 1) if inp.ndim == 1 else inp                 # (B, I)
    preds, outputs, hc = decoder_decode(packed, x[None], dec_outputs, enc_outputs, hidden)
    return preds[0], outputs[0], hc


# ---------------------------------------------------------------------------
# pure-JAX reference mirroring the PyTorch forward (require_attention=True)
# ---------------------------------------------------------------------------
def decoder_reference(params, inp, dec_outputs, enc_outputs, hidden):
    x = inp.reshape(-1, 1) if inp.ndim == 1 else inp
    h0, c0 = hidden
    s_len = enc_outputs.shape[0]
    enc_bse = jnp.transpose(enc_outputs, (1, 0, 2))                  # (B, S, E)
    hid_rep = jnp.repeat(dec_outputs[:, None, :], s_len, axis=1)     # (B, S, Dd)
    energy = jnp.tanh(jnp.concatenate([hid_rep, enc_bse], axis=2) @ params["wa"].T
                      + params["ba"])
    scores = (energy @ params["v"].T)[..., 0]                        # (B, S)
    attn = jax.nn.softmax(scores, axis=1)
    wc = jnp.einsum("bs,bse->be", attn, enc_bse)                     # bmm

    rnn_in = jnp.concatenate([x, wc], axis=1)

    def cell(xin, h, c, wih, whh, bih, bhh):
        g = xin @ wih.T + h @ whh.T + bih + bhh
        i = jax.nn.sigmoid(g[:, :H]); f = jax.nn.sigmoid(g[:, H:2 * H])
        gg = jnp.tanh(g[:, 2 * H:3 * H]); o = jax.nn.sigmoid(g[:, 3 * H:])
        c2 = f * c + i * gg
        return o * jnp.tanh(c2), c2

    h_l0, c_l0 = cell(rnn_in, h0[0], c0[0], params["w_ih_l0"], params["w_hh_l0"],
                      params["b_ih_l0"], params["b_hh_l0"])
    h_l1, c_l1 = cell(h_l0, h0[1], c0[1], params["w_ih_l1"], params["w_hh_l1"],
                      params["b_ih_l1"], params["b_hh_l1"])
    outputs = h_l1
    pred = jnp.concatenate([x, wc, outputs], axis=1) @ params["wf"].T + params["bf"]
    return pred, outputs, (jnp.stack([h_l0, h_l1]), jnp.stack([c_l0, c_l1]))


def decoder_decode_reference(params, x_seq, dec_outputs, enc_outputs, hidden):
    preds, outs = [], []
    dec, hc = dec_outputs, hidden
    for t in range(x_seq.shape[0]):
        p, o, hc = decoder_reference(params, x_seq[t], dec, enc_outputs, hc)
        dec = o
        preds.append(p); outs.append(o)
    return jnp.stack(preds), jnp.stack(outs), hc


if __name__ == "__main__":
    key = jax.random.PRNGKey(0)
    kp, k1, k2, k3, k4, k5 = jax.random.split(key, 6)
    params = make_params(kp)
    packed = pack_weights(params)            # hoisted: done once per parameter set

    T = 8
    x_seq       = jax.random.normal(k1, (T, B, I), jnp.float32)
    dec_outputs = jax.random.normal(k2, (B, Dd), jnp.float32)
    enc_outputs = jax.random.normal(k3, (S, B, E), jnp.float32)
    h0          = jax.random.normal(k4, (L, B, H), jnp.float32)
    c0          = jax.random.normal(k5, (L, B, H), jnp.float32)

    # ---- single-step forward: exact semantics of the PyTorch module ----
    fwd = jax.jit(decoder_forward)
    pred, outs, (hn, cn) = fwd(packed, x_seq[0], dec_outputs, enc_outputs, (h0, c0))
    jax.block_until_ready((pred, outs, hn, cn))
    rp, ro, (rh, rc) = decoder_reference(params, x_seq[0], dec_outputs, enc_outputs, (h0, c0))
    assert np.allclose(np.asarray(pred), np.asarray(rp), atol=1e-4), "prediction mismatch"
    assert np.allclose(np.asarray(outs), np.asarray(ro), atol=1e-4), "outputs mismatch"
    assert np.allclose(np.asarray(hn),   np.asarray(rh), atol=1e-4), "h_n mismatch"
    assert np.allclose(np.asarray(cn),   np.asarray(rc), atol=1e-4), "c_n mismatch"

    # ---- fused T-step decode: one pallas_call, weights resident, state carried in VMEM ----
    dec_fn = jax.jit(decoder_decode)
    preds, outs_seq, (hn2, cn2) = dec_fn(packed, x_seq, dec_outputs, enc_outputs, (h0, c0))
    jax.block_until_ready((preds, outs_seq, hn2, cn2))
    rps, ros, (rh2, rc2) = decoder_decode_reference(params, x_seq, dec_outputs, enc_outputs,
                                                    (h0, c0))
    assert np.allclose(np.asarray(preds),    np.asarray(rps), atol=1e-4), "seq prediction mismatch"
    assert np.allclose(np.asarray(outs_seq), np.asarray(ros), atol=1e-4), "seq outputs mismatch"
    assert np.allclose(np.asarray(hn2),      np.asarray(rh2), atol=1e-4), "seq h_n mismatch"
    assert np.allclose(np.asarray(cn2),      np.asarray(rc2), atol=1e-4), "seq c_n mismatch"
    print("KERNEL_OK")
</pallas_src>

<mosaic_0001>
module attributes {stable_mosaic.version = 11 : i64} {
  func.func @decoder_step_kernel(%arg0: i32, %arg1: memref<1x8x1xf32, #tpu.memory_space<vmem>>, %arg2: memref<40x32xf32, #tpu.memory_space<vmem>>, %arg3: memref<8x8x32xf32, #tpu.memory_space<vmem>>, %arg4: memref<80x32xf32, #tpu.memory_space<vmem>>, %arg5: memref<144x128xf32, #tpu.memory_space<vmem>>, %arg6: memref<1x8x136xf32, #tpu.memory_space<vmem>>, %arg7: memref<40x32xf32, #tpu.memory_space<vmem>>, %arg8: memref<8x8x32xf32, #tpu.memory_space<vmem>>) attributes {dimension_semantics = [#tpu.dimension_semantics<arbitrary>], iteration_bounds = array<i64: 1>, scalar_prefetch = 0 : i64, scratch_operands = 2 : i64, tpu.core_type = #tpu.core_type<tc>, window_params = [{transform_indices = @transform_0, window_bounds = array<i64: 1, 8, 1>}, {pipeline_mode = #tpu.pipeline_mode<synchronous>, transform_indices = @transform_1, window_bounds = array<i64: 40, 32>}, {pipeline_mode = #tpu.pipeline_mode<synchronous>, transform_indices = @transform_2, window_bounds = array<i64: 8, 8, 32>}, {pipeline_mode = #tpu.pipeline_mode<synchronous>, transform_indices = @transform_3, window_bounds = array<i64: 80, 32>}, {pipeline_mode = #tpu.pipeline_mode<synchronous>, transform_indices = @transform_4, window_bounds = array<i64: 144, 128>}, {transform_indices = @transform_5, window_bounds = array<i64: 1, 8, 136>}]} {
    %c0_i32 = arith.constant 0 : i32
    %0 = arith.cmpi eq, %arg0, %c0_i32 : i32
    %1 = arith.extui %0 : i1 to i32
    %c0_i32_0 = arith.constant 0 : i32
    %2 = arith.cmpi ne, %1, %c0_i32_0 : i32
    scf.if %2 {
      %c0_68 = arith.constant 0 : index
      %c0_69 = arith.constant 0 : index
      %153 = vector.load %arg2[%c0_68, %c0_69] : memref<40x32xf32, #tpu.memory_space<vmem>>, vector<40x32xf32>
      %c0_70 = arith.constant 0 : index
      %c0_71 = arith.constant 0 : index
      %154 = vector.load %arg7[%c0_70, %c0_71] : memref<40x32xf32, #tpu.memory_space<vmem>>, vector<40x32xf32>
      tpu.vector_store %arg7[%c0_70, %c0_71], %153 {strides = array<i32>} : memref<40x32xf32, #tpu.memory_space<vmem>>, vector<40x32xf32>,
      %c0_72 = arith.constant 0 : index
      %c0_73 = arith.constant 0 : index
      %c0_74 = arith.constant 0 : index
      %155 = vector.load %arg3[%c0_72, %c0_73, %c0_74] : memref<8x8x32xf32, #tpu.memory_space<vmem>>, vector<8x8x32xf32>
      %156 = vector.shape_cast %155 : vector<8x8x32xf32> to vector<64x32xf32>
      %c32_75 = arith.constant 32 : index
      %c0_76 = arith.constant 0 : index
      %157 = vector.load %arg4[%c32_75, %c0_76] : memref<80x32xf32, #tpu.memory_space<vmem>>, vector<32x32xf32>
      %cst_77 = arith.constant dense<0.000000e+00> : vector<64x32xf32>
      %158 = tpu.matmul %156, %157, %cst_77 {dimension_numbers = #tpu.dot_dimension_numbers<[1], [0], [0], [1], [0, 0, 1, 1], [], []>} : vector<64x32xf32>, vector<32x32xf32>, vector<64x32xf32> -> vector<64x32xf32>
      %159 = vector.shape_cast %158 : vector<64x32xf32> to vector<8x8x32xf32>
      %c0_78 = arith.constant 0 : index
      %c0_79 = arith.constant 0 : index
      %c0_80 = arith.constant 0 : index
      %160 = vector.load %arg8[%c0_78, %c0_79, %c0_80] : memref<8x8x32xf32, #tpu.memory_space<vmem>>, vector<8x8x32xf32>
      tpu.vector_store %arg8[%c0_78, %c0_79, %c0_80], %159 {strides = array<i32>} : memref<8x8x32xf32, #tpu.memory_space<vmem>>, vector<8x8x32xf32>,
    } else {
    }
    %c0 = arith.constant 0 : index
    %c0_1 = arith.constant 0 : index
    %3 = vector.load %arg4[%c0, %c0_1] : memref<80x32xf32, #tpu.memory_space<vmem>>, vector<32x32xf32>
    %c64 = arith.constant 64 : index
    %c0_2 = arith.constant 0 : index
    %4 = vector.load %arg4[%c64, %c0_2] : memref<80x32xf32, #tpu.memory_space<vmem>>, vector<8x32xf32>
    %5 = vector.extract_strided_slice %4 {offsets = [0, 0], sizes = [1, 32], strides = [1, 1]} : vector<8x32xf32> to vector<1x32xf32>
    %6 = vector.extract_strided_slice %4 {offsets = [1, 0], sizes = [1, 32], strides = [1, 1]} : vector<8x32xf32> to vector<1x32xf32>
    %c72 = arith.constant 72 : index
    %c0_3 = arith.constant 0 : index
    %7 = vector.load %arg4[%c72, %c0_3] : memref<80x32xf32, #tpu.memory_space<vmem>>, vector<8x32xf32>
    %8 = vector.extract_strided_slice %7 {offsets = [0, 0], sizes = [1, 32], strides = [1, 1]} : vector<8x32xf32> to vector<1x32xf32>
    %9 = vector.extract_strided_slice %7 {offsets = [1, 0], sizes = [1, 32], strides = [1, 1]} : vector<8x32xf32> to vector<1x32xf32>
    %10 = vector.extract_strided_slice %7 {offsets = [2, 0], sizes = [1, 1], strides = [1, 1]} : vector<8x32xf32> to vector<1x1xf32>
    %11 = vector.extract_strided_slice %7 {offsets = [2, 1], sizes = [1, 1], strides = [1, 1]} : vector<8x32xf32> to vector<1x1xf32>
    %c0_4 = arith.constant 0 : index
    %c0_5 = arith.constant 0 : index
    %c0_6 = arith.constant 0 : index
    %12 = vector.load %arg1[%c0_4, %c0_5, %c0_6] : memref<1x8x1xf32, #tpu.memory_space<vmem>>, vector<1x8x1xf32>
    %13 = vector.shape_cast %12 : vector<1x8x1xf32> to vector<8x1xf32>
    %c0_7 = arith.constant 0 : index
    %c0_8 = arith.constant 0 : index
    %14 = vector.load %arg7[%c0_7, %c0_8] : memref<40x32xf32, #tpu.memory_space<vmem>>, vector<8x32xf32>
    %c8 = arith.constant 8 : index
    %c0_9 = arith.constant 0 : index
    %15 = vector.load %arg7[%c8, %c0_9] : memref<40x32xf32, #tpu.memory_space<vmem>>, vector<8x32xf32>
    %c16 = arith.constant 16 : index
    %c0_10 = arith.constant 0 : index
    %16 = vector.load %arg7[%c16, %c0_10] : memref<40x32xf32, #tpu.memory_space<vmem>>, vector<8x32xf32>
    %c24 = arith.constant 24 : index
    %c0_11 = arith.constant 0 : index
    %17 = vector.load %arg7[%c24, %c0_11] : memref<40x32xf32, #tpu.memory_space<vmem>>, vector<8x32xf32>
    %c32 = arith.constant 32 : index
    %c0_12 = arith.constant 0 : index
    %18 = vector.load %arg7[%c32, %c0_12] : memref<40x32xf32, #tpu.memory_space<vmem>>, vector<8x32xf32>
    %cst = arith.constant dense<0.000000e+00> : vector<8x32xf32>
    %19 = tpu.matmul %14, %3, %cst {dimension_numbers = #tpu.dot_dimension_numbers<[1], [0], [0], [1], [0, 0, 1, 1], [], []>} : vector<8x32xf32>, vector<32x32xf32>, vector<8x32xf32> -> vector<8x32xf32>
    %20 = vector.broadcast %5 : vector<1x32xf32> to vector<8x32xf32>
    %21 = arith.addf %19, %20 : vector<8x32xf32>
    %c0_13 = arith.constant 0 : index
    %c0_14 = arith.constant 0 : index
    %c0_15 = arith.constant 0 : index
    %22 = vector.load %arg8[%c0_13, %c0_14, %c0_15] : memref<8x8x32xf32, #tpu.memory_space<vmem>>, vector<8x8x32xf32>
    %23 = vector.shape_cast %21 : vector<8x32xf32> to vector<1x8x32xf32>
    %24 = vector.broadcast %23 : vector<1x8x32xf32> to vector<8x8x32xf32>
    %25 = arith.addf %22, %24 : vector<8x8x32xf32>
    %26 = math.tanh %25 : vector<8x8x32xf32>
    %27 = vector.shape_cast %6 : vector<1x32xf32> to vector<1x1x32xf32>
    %28 = vector.broadcast %27 : vector<1x1x32xf32> to vector<8x8x32xf32>
    %29 = arith.mulf %26, %28 : vector<8x8x32xf32>
    %cst_16 = arith.constant dense<0.000000e+00> : vector<8x8xf32>
    %30 = vector.multi_reduction <add>, %29, %cst_16 [2] : vector<8x8x32xf32> to vector<8x8xf32>
    %31 = vector.shape_cast %30 : vector<8x8xf32> to vector<8x8x1xf32>
    %cst_17 = arith.constant dense<0xFF800000> : vector<8x1xf32>
    %32 = vector.multi_reduction <maximumf>, %31, %cst_17 [0] : vector<8x8x1xf32> to vector<8x1xf32>
    %33 = vector.shape_cast %32 : vector<8x1xf32> to vector<1x8x1xf32>
    %34 = vector.broadcast %33 : vector<1x8x1xf32> to vector<8x8x1xf32>
    %35 = arith.subf %31, %34 : vector<8x8x1xf32>
    %36 = math.exp %35 : vector<8x8x1xf32>
    %cst_18 = arith.constant dense<0.000000e+00> : vector<8x1xf32>
    %37 = vector.multi_reduction <add>, %36, %cst_18 [0] : vector<8x8x1xf32> to vector<8x1xf32>
    %38 = vector.shape_cast %37 : vector<8x1xf32> to vector<1x8x1xf32>
    %39 = vector.broadcast %38 : vector<1x8x1xf32> to vector<8x8x1xf32>
    %40 = arith.divf %36, %39 : vector<8x8x1xf32>
    %c0_19 = arith.constant 0 : index
    %c0_20 = arith.constant 0 : index
    %c0_21 = arith.constant 0 : index
    %41 = vector.load %arg3[%c0_19, %c0_20, %c0_21] : memref<8x8x32xf32, #tpu.memory_space<vmem>>, vector<8x8x32xf32>
    %42 = vector.broadcast %40 : vector<8x8x1xf32> to vector<8x8x32xf32>
    %43 = arith.mulf %42, %41 : vector<8x8x32xf32>
    %cst_22 = arith.constant dense<0.000000e+00> : vector<8x32xf32>
    %44 = vector.multi_reduction <add>, %43, %cst_22 [0] : vector<8x8x32xf32> to vector<8x32xf32>
    %c64_23 = arith.constant 64 : index
    %c0_24 = arith.constant 0 : index
    %45 = vector.load %arg5[%c64_23, %c0_24] : memref<144x128xf32, #tpu.memory_space<vmem>>, vector<8x128xf32>
    %c0_25 = arith.constant 0 : index
    %c0_26 = arith.constant 0 : index
    %46 = vector.load %arg5[%c0_25, %c0_26] : memref<144x128xf32, #tpu.memory_space<vmem>>, vector<32x128xf32>
    %cst_27 = arith.constant dense<0.000000e+00> : vector<8x128xf32>
    %47 = tpu.matmul %44, %46, %cst_27 {dimension_numbers = #tpu.dot_dimension_numbers<[1], [0], [0], [1], [0, 0, 1, 1], [], []>} : vector<8x32xf32>, vector<32x128xf32>, vector<8x128xf32> -> vector<8x128xf32>
    %c32_28 = arith.constant 32 : index
    %c0_29 = arith.constant 0 : index
    %48 = vector.load %arg5[%c32_28, %c0_29] : memref<144x128xf32, #tpu.memory_space<vmem>>, vector<32x128xf32>
    %cst_30 = arith.constant dense<0.000000e+00> : vector<8x128xf32>
    %49 = tpu.matmul %15, %48, %cst_30 {dimension_numbers = #tpu.dot_dimension_numbers<[1], [0], [0], [1], [0, 0, 1, 1], [], []>} : vector<8x32xf32>, vector<32x128xf32>, vector<8x128xf32> -> vector<8x128xf32>
    %50 = arith.addf %47, %49 : vector<8x128xf32>
    %51 = vector.extract_strided_slice %45 {offsets = [1, 0], sizes = [1, 128], strides = [1, 1]} : vector<8x128xf32> to vector<1x128xf32>
    %52 = vector.broadcast %13 : vector<8x1xf32> to vector<8x128xf32>
    %53 = vector.broadcast %51 : vector<1x128xf32> to vector<8x128xf32>
    %54 = arith.mulf %52, %53 : vector<8x128xf32>
    %55 = arith.addf %50, %54 : vector<8x128xf32>
    %56 = vector.extract_strided_slice %45 {offsets = [0, 0], sizes = [1, 128], strides = [1, 1]} : vector<8x128xf32> to vector<1x128xf32>
    %57 = vector.broadcast %56 : vector<1x128xf32> to vector<8x128xf32>
    %58 = arith.addf %55, %57 : vector<8x128xf32>
    %59 = vector.extract_strided_slice %58 {offsets = [0, 0], sizes = [8, 32], strides = [1, 1]} : vector<8x128xf32> to vector<8x32xf32>
    %60 = arith.negf %59 : vector<8x32xf32>
    %61 = math.exp %60 : vector<8x32xf32>
    %cst_31 = arith.constant 1.000000e+00 : f32
    %62 = vector.broadcast %cst_31 : f32 to vector<8x32xf32>
    %63 = arith.addf %62, %61 : vector<8x32xf32>
    %64 = arith.divf %62, %63 : vector<8x32xf32>
    %65 = vector.extract_strided_slice %58 {offsets = [0, 32], sizes = [8, 32], strides = [1, 1]} : vector<8x128xf32> to vector<8x32xf32>
    %66 = arith.negf %65 : vector<8x32xf32>
    %67 = math.exp %66 : vector<8x32xf32>
    %cst_32 = arith.constant 1.000000e+00 : f32
    %68 = vector.broadcast %cst_32 : f32 to vector<8x32xf32>
    %69 = arith.addf %68, %67 : vector<8x32xf32>
    %70 = arith.divf %68, %69 : vector<8x32xf32>
    %71 = vector.extract_strided_slice %58 {offsets = [0, 64], sizes = [8, 32], strides = [1, 1]} : vector<8x128xf32> to vector<8x32xf32>
    %72 = math.tanh %71 : vector<8x32xf32>
    %73 = vector.extract_strided_slice %58 {offsets = [0, 96], sizes = [8, 32], strides = [1, 1]} : vector<8x128xf32> to vector<8x32xf32>
    %74 = arith.negf %73 : vector<8x32xf32>
    %75 = math.exp %74 : vector<8x32xf32>
    %cst_33 = arith.constant 1.000000e+00 : f32
    %76 = vector.broadcast %cst_33 : f32 to vector<8x32xf32>
    %77 = arith.addf %76, %75 : vector<8x32xf32>
    %78 = arith.divf %76, %77 : vector<8x32xf32>
    %79 = arith.mulf %70, %17 : vector<8x32xf32>
    %80 = arith.mulf %64, %72 : vector<8x32xf32>
    %81 = arith.addf %79, %80 : vector<8x32xf32>
    %82 = math.tanh %81 : vector<8x32xf32>
    %83 = arith.mulf %78, %82 : vector<8x32xf32>
    %c72_34 = arith.constant 72 : index
    %c0_35 = arith.constant 0 : index
    %84 = vector.load %arg5[%c72_34, %c0_35] : memref<144x128xf32, #tpu.memory_space<vmem>>, vector<32x128xf32>
    %cst_36 = arith.constant dense<0.000000e+00> : vector<8x128xf32>
    %85 = tpu.matmul %83, %84, %cst_36 {dimension_numbers = #tpu.dot_dimension_numbers<[1], [0], [0], [1], [0, 0, 1, 1], [], []>} : vector<8x32xf32>, vector<32x128xf32>, vector<8x128xf32> -> vector<8x128xf32>
    %c104 = arith.constant 104 : index
    %c0_37 = arith.constant 0 : index
    %86 = vector.load %arg5[%c104, %c0_37] : memref<144x128xf32, #tpu.memory_space<vmem>>, vector<32x128xf32>
    %cst_38 = arith.constant dense<0.000000e+00> : vector<8x128xf32>
    %87 = tpu.matmul %16, %86, %cst_38 {dimension_numbers = #tpu.dot_dimension_numbers<[1], [0], [0], [1], [0, 0, 1, 1], [], []>} : vector<8x32xf32>, vector<32x128xf32>, vector<8x128xf32> -> vector<8x128xf32>
    %88 = arith.addf %85, %87 : vector<8x128xf32>
    %c136 = arith.constant 136 : index
    %c0_39 = arith.constant 0 : index
    %89 = vector.load %arg5[%c136, %c0_39] : memref<144x128xf32, #tpu.memory_space<vmem>>, vector<1x128xf32>
    %90 = vector.broadcast %89 : vector<1x128xf32> to vector<8x128xf32>
    %91 = arith.addf %88, %90 : vector<8x128xf32>
    %92 = vector.extract_strided_slice %91 {offsets = [0, 0], sizes = [8, 32], strides = [1, 1]} : vector<8x128xf32> to vector<8x32xf32>
    %93 = arith.negf %92 : vector<8x32xf32>
    %94 = math.exp %93 : vector<8x32xf32>
    %cst_40 = arith.constant 1.000000e+00 : f32
    %95 = vector.broadcast %cst_40 : f32 to vector<8x32xf32>
    %96 = arith.addf %95, %94 : vector<8x32xf32>
    %97 = arith.divf %95, %96 : vector<8x32xf32>
    %98 = vector.extract_strided_slice %91 {offsets = [0, 32], sizes = [8, 32], strides = [1, 1]} : vector<8x128xf32> to vector<8x32xf32>
    %99 = arith.negf %98 : vector<8x32xf32>
    %100 = math.exp %99 : vector<8x32xf32>
    %cst_41 = arith.constant 1.000000e+00 : f32
    %101 = vector.broadcast %cst_41 : f32 to vector<8x32xf32>
    %102 = arith.addf %101, %100 : vector<8x32xf32>
    %103 = arith.divf %101, %102 : vector<8x32xf32>
    %104 = vector.extract_strided_slice %91 {offsets = [0, 64], sizes = [8, 32], strides = [1, 1]} : vector<8x128xf32> to vector<8x32xf32>
    %105 = math.tanh %104 : vector<8x32xf32>
    %106 = vector.extract_strided_slice %91 {offsets = [0, 96], sizes = [8, 32], strides = [1, 1]} : vector<8x128xf32> to vector<8x32xf32>
    %107 = arith.negf %106 : vector<8x32xf32>
    %108 = math.exp %107 : vector<8x32xf32>
    %cst_42 = arith.constant 1.000000e+00 : f32
    %109 = vector.broadcast %cst_42 : f32 to vector<8x32xf32>
    %110 = arith.addf %109, %108 : vector<8x32xf32>
    %111 = arith.divf %109, %110 : vector<8x32xf32>
    %112 = arith.mulf %103, %18 : vector<8x32xf32>
    %113 = arith.mulf %97, %105 : vector<8x32xf32>
    %114 = arith.addf %112, %113 : vector<8x32xf32>
    %115 = math.tanh %114 : vector<8x32xf32>
    %116 = arith.mulf %111, %115 : vector<8x32xf32>
    %117 = vector.broadcast %8 : vector<1x32xf32> to vector<8x32xf32>
    %118 = arith.mulf %44, %117 : vector<8x32xf32>
    %cst_43 = arith.constant dense<0.000000e+00> : vector<8xf32>
    %119 = vector.multi_reduction <add>, %118, %cst_43 [1] : vector<8x32xf32> to vector<8xf32>
    %120 = vector.shape_cast %119 : vector<8xf32> to vector<8x1xf32>
    %121 = vector.broadcast %9 : vector<1x32xf32> to vector<8x32xf32>
    %122 = arith.mulf %116, %121 : vector<8x32xf32>
    %cst_44 = arith.constant dense<0.000000e+00> : vector<8xf32>
    %123 = vector.multi_reduction <add>, %122, %cst_44 [1] : vector<8x32xf32> to vector<8xf32>
    %124 = vector.shape_cast %123 : vector<8xf32> to vector<8x1xf32>
    %125 = arith.addf %120, %124 : vector<8x1xf32>
    %126 = vector.broadcast %10 : vector<1x1xf32> to vector<8x1xf32>
    %127 = arith.mulf %13, %126 : vector<8x1xf32>
    %128 = arith.addf %125, %127 : vector<8x1xf32>
    %129 = vector.broadcast %11 : vector<1x1xf32> to vector<8x1xf32>
    %130 = arith.addf %128, %129 : vector<8x1xf32>
    %c0_45 = arith.constant 0 : index
    %c0_46 = arith.constant 0 : index
    %131 = vector.load %arg7[%c0_45, %c0_46] : memref<40x32xf32, #tpu.memory_space<vmem>>, vector<8x32xf32>
    tpu.vector_store %arg7[%c0_45, %c0_46], %116 {strides = array<i32>} : memref<40x32xf32, #tpu.memory_space<vmem>>, vector<8x32xf32>,
    %c8_47 = arith.constant 8 : index
    %c0_48 = arith.constant 0 : index
    %132 = vector.load %arg7[%c8_47, %c0_48] : memref<40x32xf32, #tpu.memory_space<vmem>>, vector<8x32xf32>
    tpu.vector_store %arg7[%c8_47, %c0_48], %83 {strides = array<i32>} : memref<40x32xf32, #tpu.memory_space<vmem>>, vector<8x32xf32>,
    %c16_49 = arith.constant 16 : index
    %c0_50 = arith.constant 0 : index
    %133 = vector.load %arg7[%c16_49, %c0_50] : memref<40x32xf32, #tpu.memory_space<vmem>>, vector<8x32xf32>
    tpu.vector_store %arg7[%c16_49, %c0_50], %116 {strides = array<i32>} : memref<40x32xf32, #tpu.memory_space<vmem>>, vector<8x32xf32>,
    %c24_51 = arith.constant 24 : index
    %c0_52 = arith.constant 0 : index
    %134 = vector.load %arg7[%c24_51, %c0_52] : memref<40x32xf32, #tpu.memory_space<vmem>>, vector<8x32xf32>
    tpu.vector_store %arg7[%c24_51, %c0_52], %81 {strides = array<i32>} : memref<40x32xf32, #tpu.memory_space<vmem>>, vector<8x32xf32>,
    %c32_53 = arith.constant 32 : index
    %c0_54 = arith.constant 0 : index
    %135 = vector.load %arg7[%c32_53, %c0_54] : memref<40x32xf32, #tpu.memory_space<vmem>>, vector<8x32xf32>
    tpu.vector_store %arg7[%c32_53, %c0_54], %114 {strides = array<i32>} : memref<40x32xf32, #tpu.memory_space<vmem>>, vector<8x32xf32>,
    %c0_55 = arith.constant 0 : index
    %c0_56 = arith.constant 0 : index
    %c0_57 = arith.constant 0 : index
    %136 = vector.load %arg6[%c0_55, %c0_56, %c0_57] : memref<1x8x136xf32, #tpu.memory_space<vmem>>, vector<1x8x32xf32>
    %137 = vector.shape_cast %136 : vector<1x8x32xf32> to vector<8x32xf32>
    %138 = vector.shape_cast %116 : vector<8x32xf32> to vector<1x8x32xf32>
    tpu.vector_store %arg6[%c0_55, %c0_56, %c0_57], %138 {strides = array<i32>} : memref<1x8x136xf32, #tpu.memory_space<vmem>>, vector<1x8x32xf32>,
    %c0_58 = arith.constant 0 : index
    %c0_59 = arith.constant 0 : index
    %c32_60 = arith.constant 32 : index
    %139 = vector.load %arg6[%c0_58, %c0_59, %c32_60] : memref<1x8x136xf32, #tpu.memory_space<vmem>>, vector<1x8x32xf32>
    %140 = vector.shape_cast %139 : vector<1x8x32xf32> to vector<8x32xf32>
    %141 = vector.shape_cast %83 : vector<8x32xf32> to vector<1x8x32xf32>
    tpu.vector_store %arg6[%c0_58, %c0_59, %c32_60], %141 {strides = array<i32>} : memref<1x8x136xf32, #tpu.memory_space<vmem>>, vector<1x8x32xf32>,
    %c0_61 = arith.constant 0 : index
    %c0_62 = arith.constant 0 : index
    %c64_63 = arith.constant 64 : index
    %142 = vector.load %arg6[%c0_61, %c0_62, %c64_63] : memref<1x8x136xf32, #tpu.memory_space<vmem>>, vector<1x8x32xf32>
    %143 = vector.shape_cast %142 : vector<1x8x32xf32> to vector<8x32xf32>
    %144 = vector.shape_cast %81 : vector<8x32xf32> to vector<1x8x32xf32>
    tpu.vector_store %arg6[%c0_61, %c0_62, %c64_63], %144 {strides = array<i32>} : memref<1x8x136xf32, #tpu.memory_space<vmem>>, vector<1x8x32xf32>,
    %c0_64 = arith.constant 0 : index
    %c0_65 = arith.constant 0 : index
    %c96 = arith.constant 96 : index
    %145 = vector.load %arg6[%c0_64, %c0_65, %c96] : memref<1x8x136xf32, #tpu.memory_space<vmem>>, vector<1x8x32xf32>
    %146 = vector.shape_cast %145 : vector<1x8x32xf32> to vector<8x32xf32>
    %147 = vector.shape_cast %114 : vector<8x32xf32> to vector<1x8x32xf32>
    tpu.vector_store %arg6[%c0_64, %c0_65, %c96], %147 {strides = array<i32>} : memref<1x8x136xf32, #tpu.memory_space<vmem>>, vector<1x8x32xf32>,
    %148 = vector.shape_cast %130 : vector<8x1xf32> to vector<8x1xf32>
    %149 = vector.broadcast %148 : vector<8x1xf32> to vector<8x8xf32>
    %c0_66 = arith.constant 0 : index
    %c0_67 = arith.constant 0 : index
    %c128 = arith.constant 128 : index
    %150 = vector.load %arg6[%c0_66, %c0_67, %c128] : memref<1x8x136xf32, #tpu.memory_space<vmem>>, vector<1x8x8xf32>
    %151 = vector.shape_cast %150 : vector<1x8x8xf32> to vector<8x8xf32>
    %152 = vector.shape_cast %149 : vector<8x8xf32> to vector<1x8x8xf32>
    tpu.vector_store %arg6[%c0_66, %c0_67, %c128], %152 {strides = array<i32>} : memref<1x8x136xf32, #tpu.memory_space<vmem>>, vector<1x8x8xf32>,
    return
  }
  func.func @transform_0(%arg0: i32) -> (i32, i32, i32) {
    %c0_i32 = arith.constant 0 : i32
    %c0_i32_0 = arith.constant 0 : i32
    %c0_i32_1 = arith.constant 0 : i32
    return %arg0, %c0_i32, %c0_i32_0 : i32, i32, i32
  }
  func.func @transform_1(%arg0: i32) -> (i32, i32) {
    %c0_i32 = arith.constant 0 : i32
    %c0_i32_0 = arith.constant 0 : i32
    %c0_i32_1 = arith.constant 0 : i32
    return %c0_i32, %c0_i32_0 : i32, i32
  }
  func.func @transform_2(%arg0: i32) -> (i32, i32, i32) {
    %c0_i32 = arith.constant 0 : i32
    %c0_i32_0 = arith.constant 0 : i32
    %c0_i32_1 = arith.constant 0 : i32
    %c0_i32_2 = arith.constant 0 : i32
    return %c0_i32, %c0_i32_0, %c0_i32_1 : i32, i32, i32
  }
  func.func @transform_3(%arg0: i32) -> (i32, i32) {
    %c0_i32 = arith.constant 0 : i32
    %c0_i32_0 = arith.constant 0 : i32
    %c0_i32_1 = arith.constant 0 : i32
    return %c0_i32, %c0_i32_0 : i32, i32
  }
  func.func @transform_4(%arg0: i32) -> (i32, i32) {
    %c0_i32 = arith.constant 0 : i32
    %c0_i32_0 = arith.constant 0 : i32
    %c0_i32_1 = arith.constant 0 : i32
    return %c0_i32, %c0_i32_0 : i32, i32
  }
  func.func @transform_5(%arg0: i32) -> (i32, i32, i32) {
    %c0_i32 = arith.constant 0 : i32
    %c0_i32_0 = arith.constant 0 : i32
    %c0_i32_1 = arith.constant 0 : i32
    return %arg0, %c0_i32, %c0_i32_0 : i32, i32, i32
  }
}

</mosaic_0001>

<llo_original>
// kernel: decoder_forward.1
$region0: #{decoder_forward.1}
  #allocation0 [shape = 'u32[]', space=smem, size = 0x4, offset = 0x4, fixed_abs, tag = 'smem constant byte address 0x4 - core index']
  #allocation1 [shape = 'u32[144,128]{1,0:T(1,128)}', space=vmem, size = 0x12000, scoped, tag = 'internal scratch']
  #allocation2 [shape = 'f32[40,32]{1,0:T(8,128)}', space=vmem, size = 0x5000, scoped, tag = 'scratch operand']
  #allocation3 [shape = 'f32[8,8,32]{2,1,0:T(8,128)}', space=vmem, size = 0x8000, scoped, tag = 'scratch operand']
  %s0 = inlined_call_operand.vmem [shape: f32[1,8,1], index: 0, kind: input, shape index: {}]
  %s1 = inlined_call_operand.vmem [shape: f32[40,32], index: 1, kind: input, shape index: {}]
  %s2 = inlined_call_operand.vmem [shape: f32[8,8,32], index: 2, kind: input, shape index: {}]
  %s3 = inlined_call_operand.vmem [shape: f32[80,32], index: 3, kind: input, shape index: {}]
  %s4 = inlined_call_operand.vmem [shape: f32[144,128], index: 4, kind: input, shape index: {}]
  %s5 = inlined_call_operand.vmem [shape: f32[1,8,136], index: 5, kind: output, shape index: {}]
  %s6 = sld [smem:[#allocation0]]
  $region34: #{decoder_forward.1} parent=0
    _
  %s8 = ssub.s32 1, %s6
  %s9 = scalar_select 0, %s8, %s6
  // Predicated region
  $region2: #{decoder_forward.1} parent=0 // pred_check
    _
  $region3: #{decoder_forward.1} parent=0 // pred_check_branch
    %11 = sbr.rel (0) target = $region5
  $region4: #{decoder_forward.1} parent=0 // pred_region
    _
  $region5: #{decoder_forward.1} parent=0 // pred_fallthru
    _
  // Predicated region
  $region6: #{decoder_forward.1} parent=0 // pred_check
    _
  $region7: #{decoder_forward.1} parent=0 // pred_check_branch
    %13 = sbr.rel (0) target = $region9
  $region8: #{decoder_forward.1} parent=0 // pred_region
    _
  $region9: #{decoder_forward.1} parent=0 // pred_fallthru
    _
  // Predicated region
  $region10: #{decoder_forward.1} parent=0 // pred_check
    _
  $region11: #{decoder_forward.1} parent=0 // pred_check_branch
    %15 = sbr.rel (0) target = $region13
  $region12: #{decoder_forward.1} parent=0 // pred_region
    _
  $region13: #{decoder_forward.1} parent=0 // pred_fallthru
    _
  // Predicated region
  $region14: #{decoder_forward.1} parent=0 // pred_check
    _
  $region15: #{decoder_forward.1} parent=0 // pred_check_branch
    %17 = sbr.rel (0) target = $region17
  $region16: #{decoder_forward.1} parent=0 // pred_region
    _
  $region17: #{decoder_forward.1} parent=0 // pred_fallthru
    _
  // Predicated region
  $region18: #{decoder_forward.1} parent=0 // pred_check
    _
  $region19: #{decoder_forward.1} parent=0 // pred_check_branch
    %19 = sbr.rel (0) target = $region21
  $region20: #{decoder_forward.1} parent=0 // pred_region
    _
  $region21: #{decoder_forward.1} parent=0 // pred_fallthru
    _
  %p20 = scmp.eq.s32.totalorder 0, 0
  // Predicated region
  $region22: #{decoder_forward.1} parent=0 // pred_check
    %p21 = pneg %p20
  $region23: #{decoder_forward.1} parent=0 // pred_check_branch
    %23 = sbr.rel (%p21) target = $region25
  $region24: #{decoder_forward.1} parent=0 // pred_region
    %v24 = vld [vmem:[%s1] sm:$0xff]
    %v25 = vld [vmem:[%s1 + $0x8] sm:$0xff]
    %v26 = vld [vmem:[%s1 + $0x10] sm:$0xff]
    %v27 = vld [vmem:[%s1 + $0x18] sm:$0xff]
    %v28 = vld [vmem:[%s1 + $0x20] sm:$0xff]
    %vm29 = vcmask 261120
    %30 = vst.msk [vmem:[#allocation2] sm:$0xff] %vm29, %v24
    %31 = vst.msk [vmem:[#allocation2 + $0x8] sm:$0xff] %vm29, %v25
    %32 = vst.msk [vmem:[#allocation2 + $0x10] sm:$0xff] %vm29, %v26
    %33 = vst.msk [vmem:[#allocation2 + $0x18] sm:$0xff] %vm29, %v27
    %34 = vst.msk [vmem:[#allocation2 + $0x20] sm:$0xff] %vm29, %v28
    %v35 = vld [vmem:[%s2] sm:$0xff]
    %v36 = vld [vmem:[%s2 + $0x8] sm:$0xff]
    %v37 = vld [vmem:[%s2 + $0x10] sm:$0xff]
    %v38 = vld [vmem:[%s2 + $0x18] sm:$0xff]
    %v39 = vld [vmem:[%s2 + $0x20] sm:$0xff]
    %v40 = vld [vmem:[%s2 + $0x28] sm:$0xff]
    %v41 = vld [vmem:[%s2 + $0x30] sm:$0xff]
    %v42 = vld [vmem:[%s2 + $0x38] sm:$0xff]
    %v43 = vld [vmem:[%s3 + $0x20] sm:$0xff]
    %v44 = vld [vmem:[%s3 + $0x28] sm:$0xff]
    %v45 = vld [vmem:[%s3 + $0x30] sm:$0xff]
    %v46 = vld [vmem:[%s3 + $0x38] sm:$0xff]
    %v48 = vsel %vm29, %v35, 0
    %v51 = vsel %vm29, %v36, 0
    %v54 = vsel %vm29, %v37, 0
    %v57 = vsel %vm29, %v38, 0
    %v60 = vsel %vm29, %v39, 0
    %v63 = vsel %vm29, %v40, 0
    %v66 = vsel %vm29, %v41, 0
    %v69 = vsel %vm29, %v42, 0
    %71 = vmatprep.subr.mxu0 0.0
    %72 = vmatpush1.msra.mxu0 %v43
    %73 = vmatprep.subr.mxu0 0.0
    %74 = vmatpush1.msra.mxu0 %v44
    %75 = vmatprep.subr.mxu0 0.0
    %76 = vmatpush1.msra.mxu0 %v45
    %77 = vmatprep.subr.mxu0 0.0
    %78 = vmatpush1.msra.mxu0 %v46
    %79 = vmatprep.subr.mxu0 0.0
    %80 = vmatpush1.msra.mxu0 0.0
    %81 = vmatprep.subr.mxu0 0.0
    %82 = vmatpush1.msra.mxu0 0.0
    %83 = vmatprep.subr.mxu0 0.0
    %84 = vmatpush1.msra.mxu0 0.0
    %85 = vmatprep.subr.mxu0 0.0
    %86 = vmatpush1.msra.mxu0 0.0
    %87 = vmatprep.subr.mxu0 0.0
    %88 = vmatpush1.msra.mxu0 0.0
    %89 = vmatprep.subr.mxu0 0.0
    %90 = vmatpush1.msra.mxu0 0.0
    %91 = vmatprep.subr.mxu0 0.0
    %92 = vmatpush1.msra.mxu0 0.0
    %93 = vmatprep.subr.mxu0 0.0
    %94 = vmatpush1.msra.mxu0 0.0
    %95 = vmatprep.subr.mxu0 0.0
    %96 = vmatpush1.msra.mxu0 0.0
    %97 = vmatprep.subr.mxu0 0.0
    %98 = vmatpush1.msra.mxu0 0.0
    %99 = vmatprep.subr.mxu0 0.0
    %100 = vmatpush1.msra.mxu0 0.0
    %101 = vmatprep.subr.mxu0 0.0
    %102 = vmatpush1.msra.mxu0 0.0
    %103 = vmatprep.subr.mxu0 0.0
    %104 = vmatpush1.msra.mxu0 0.0
    %105 = vmatprep.subr.mxu0 0.0
    %106 = vmatpush1.msra.mxu0 0.0
    %107 = vmatprep.subr.mxu0 0.0
    %108 = vmatpush1.msra.mxu0 0.0
    %109 = vmatprep.subr.mxu0 0.0
    %110 = vmatpush1.msra.mxu0 0.0
    %111 = vmatprep.subr.mxu0 0.0
    %112 = vmatpush1.msra.mxu0 0.0
    %113 = vmatprep.subr.mxu0 0.0
    %114 = vmatpush1.msra.mxu0 0.0
    %115 = vmatprep.subr.mxu0 0.0
    %116 = vmatpush1.msra.mxu0 0.0
    %117 = vmatprep.subr.mxu0 0.0
    %118 = vmatpush1.msra.mxu0 0.0
    %119 = vmatprep.subr.mxu0 0.0
    %120 = vmatpush1.msra.mxu0 0.0
    %121 = vmatprep.subr.mxu0 0.0
    %122 = vmatpush1.msra.mxu0 0.0
    %123 = vmatprep.subr.mxu0 0.0
    %124 = vmatpush1.msra.mxu0 0.0
    %125 = vmatprep.subr.mxu0 0.0
    %126 = vmatpush1.msra.mxu0 0.0
    %127 = vmatprep.subr.mxu0 0.0
    %128 = vmatpush1.msra.mxu0 0.0
    %129 = vmatprep.subr.mxu0 0.0
    %130 = vmatpush1.msra.mxu0 0.0
    %131 = vmatprep.subr.mxu0 0.0
    %132 = vmatpush1.msra.mxu0 0.0
    %133 = vmatprep.subr.mxu0 0.0
    %134 = vmatpush1.msra.mxu0 0.0
    %135 = vmatprep.mubr.f32.mxu0 0.0
    %136 = vmatmul.mubr.f32.gmra.mrb[0].mxu0 %v48
    %v137 = vpop.f32.mrb[0].mxu0
    %v138 = vadd.f32 0.0, %v137
    %v139 = vpop.f32.mrb[0].mxu0
    %140 = vmatprep.mubr.f32.mxu0 0.0
    %141 = vmatmul.mubr.f32.gmra.mrb[0].mxu0 %v51
    %v142 = vpop.f32.mrb[0].mxu0
    %v143 = vadd.f32 0.0, %v142
    %v144 = vpop.f32.mrb[0].mxu0
    %145 = vmatprep.mubr.f32.mxu0 0.0
    %146 = vmatmul.mubr.f32.gmra.mrb[0].mxu0 %v54
    %v147 = vpop.f32.mrb[0].mxu0
    %v148 = vadd.f32 0.0, %v147
    %v149 = vpop.f32.mrb[0].mxu0
    %150 = vmatprep.mubr.f32.mxu0 0.0
    %151 = vmatmul.mubr.f32.gmra.mrb[0].mxu0 %v57
    %v152 = vpop.f32.mrb[0].mxu0
    %v153 = vadd.f32 0.0, %v152
    %v154 = vpop.f32.mrb[0].mxu0
    %155 = vmatprep.mubr.f32.mxu0 0.0
    %156 = vmatmul.mubr.f32.gmra.mrb[0].mxu0 %v60
    %v157 = vpop.f32.mrb[0].mxu0
    %v158 = vadd.f32 0.0, %v157
    %v159 = vpop.f32.mrb[0].mxu0
    %160 = vmatprep.mubr.f32.mxu0 0.0
    %161 = vmatmul.mubr.f32.gmra.mrb[0].mxu0 %v63
    %v162 = vpop.f32.mrb[0].mxu0
    %v163 = vadd.f32 0.0, %v162
    %v164 = vpop.f32.mrb[0].mxu0
    %165 = vmatprep.mubr.f32.mxu0 0.0
    %166 = vmatmul.mubr.f32.gmra.mrb[0].mxu0 %v66
    %v167 = vpop.f32.mrb[0].mxu0
    %v168 = vadd.f32 0.0, %v167
    %v169 = vpop.f32.mrb[0].mxu0
    %170 = vmatprep.mubr.f32.mxu0 0.0
    %171 = vmatmul.mubr.f32.gmra.mrb[0].mxu0 %v69
    %v172 = vpop.f32.mrb[0].mxu0
    %v173 = vadd.f32 0.0, %v172
    %v174 = vpop.f32.mrb[0].mxu0
    %175 = vdwg.mxu0
    %176 = vst.msk [vmem:[#allocation3] sm:$0xff] %vm29, %v138
    %177 = vst.msk [vmem:[#allocation3 + $0x8] sm:$0xff] %vm29, %v143
    %178 = vst.msk [vmem:[#allocation3 + $0x10] sm:$0xff] %vm29, %v148
    %179 = vst.msk [vmem:[#allocation3 + $0x18] sm:$0xff] %vm29, %v153
    %180 = vst.msk [vmem:[#allocation3 + $0x20] sm:$0xff] %vm29, %v158
    %181 = vst.msk [vmem:[#allocation3 + $0x28] sm:$0xff] %vm29, %v163
    %182 = vst.msk [vmem:[#allocation3 + $0x30] sm:$0xff] %vm29, %v168
    %183 = vst.msk [vmem:[#allocation3 + $0x38] sm:$0xff] %vm29, %v173
  $region25: #{decoder_forward.1} parent=0 // pred_fallthru
    _
  %v184 = vld [vmem:[%s3] sm:$0xff]
  %v185 = vld [vmem:[%s3 + $0x8] sm:$0xff]
  %v186 = vld [vmem:[%s3 + $0x10] sm:$0xff]
  %v187 = vld [vmem:[%s3 + $0x18] sm:$0xff]
  %v188 = vld [vmem:[%s3 + $0x40] sm:$0xff]
  %v189 = vld [vmem:[%s3 + $0x48] sm:$0xff]
  %v190 = vld [vmem:[%s0] sm:$0xff]
  %v191 = vld [vmem:[#allocation2] sm:$0xff]
  %v192 = vld [vmem:[#allocation2 + $0x8] sm:$0xff]
  %v193 = vld [vmem:[#allocation2 + $0x10] sm:$0xff]
  %v194 = vld [vmem:[#allocation2 + $0x18] sm:$0xff]
  %v195 = vld [vmem:[#allocation2 + $0x20] sm:$0xff]
  %v196 = vlaneseq
  %v197 = vshrl.u32 %v196, 7
  %v198 = vsub.s32 0, %v197
  %v199 = vrot.slane %v188, %v198
  %vm200 = vcmask 261120
  %v202 = vsel %vm200, %v191, 0
  %204 = vmatprep.subr.mxu0 0.0
  %205 = vmatpush1.msra.mxu0 %v184
  %206 = vmatprep.subr.mxu0 0.0
  %207 = vmatpush1.msra.mxu0 %v185
  %208 = vmatprep.subr.mxu0 0.0
  %209 = vmatpush1.msra.mxu0 %v186
  %210 = vmatprep.subr.mxu0 0.0
  %211 = vmatpush1.msra.mxu0 %v187
  %212 = vmatprep.subr.mxu0 0.0
  %213 = vmatpush1.msra.mxu0 0.0
  %214 = vmatprep.subr.mxu0 0.0
  %215 = vmatpush1.msra.mxu0 0.0
  %216 = vmatprep.subr.mxu0 0.0
  %217 = vmatpush1.msra.mxu0 0.0
  %218 = vmatprep.subr.mxu0 0.0
  %219 = vmatpush1.msra.mxu0 0.0
  %220 = vmatprep.subr.mxu0 0.0
  %221 = vmatpush1.msra.mxu0 0.0
  %222 = vmatprep.subr.mxu0 0.0
  %223 = vmatpush1.msra.mxu0 0.0
  %224 = vmatprep.subr.mxu0 0.0
  %225 = vmatpush1.msra.mxu0 0.0
  %226 = vmatprep.subr.mxu0 0.0
  %227 = vmatpush1.msra.mxu0 0.0
  %228 = vmatprep.subr.mxu0 0.0
  %229 = vmatpush1.msra.mxu0 0.0
  %230 = vmatprep.subr.mxu0 0.0
  %231 = vmatpush1.msra.mxu0 0.0
  %232 = vmatprep.subr.mxu0 0.0
  %233 = vmatpush1.msra.mxu0 0.0
  %234 = vmatprep.subr.mxu0 0.0
  %235 = vmatpush1.msra.mxu0 0.0
  %236 = vmatprep.subr.mxu0 0.0
  %237 = vmatpush1.msra.mxu0 0.0
  %238 = vmatprep.subr.mxu0 0.0
  %239 = vmatpush1.msra.mxu0 0.0
  %240 = vmatprep.subr.mxu0 0.0
  %241 = vmatpush1.msra.mxu0 0.0
  %242 = vmatprep.subr.mxu0 0.0
  %243 = vmatpush1.msra.mxu0 0.0
  %244 = vmatprep.subr.mxu0 0.0
  %245 = vmatpush1.msra.mxu0 0.0
  %246 = vmatprep.subr.mxu0 0.0
  %247 = vmatpush1.msra.mxu0 0.0
  %248 = vmatprep.subr.mxu0 0.0
  %249 = vmatpush1.msra.mxu0 0.0
  %250 = vmatprep.subr.mxu0 0.0
  %251 = vmatpush1.msra.mxu0 0.0
  %252 = vmatprep.subr.mxu0 0.0
  %253 = vmatpush1.msra.mxu0 0.0
  %254 = vmatprep.subr.mxu0 0.0
  %255 = vmatpush1.msra.mxu0 0.0
  %256 = vmatprep.subr.mxu0 0.0
  %257 = vmatpush1.msra.mxu0 0.0
  %258 = vmatprep.subr.mxu0 0.0
  %259 = vmatpush1.msra.mxu0 0.0
  %260 = vmatprep.subr.mxu0 0.0
  %261 = vmatpush1.msra.mxu0 0.0
  %262 = vmatprep.subr.mxu0 0.0
  %263 = vmatpush1.msra.mxu0 0.0
  %264 = vmatprep.subr.mxu0 0.0
  %265 = vmatpush1.msra.mxu0 0.0
  %266 = vmatprep.subr.mxu0 0.0
  %267 = vmatpush1.msra.mxu0 0.0
  %268 = vmatprep.mubr.f32.mxu0 0.0
  %269 = vmatmul.mubr.f32.gmra.mrb[0].mxu0 %v202
  %v270 = vpop.f32.mrb[0].mxu0
  %v271 = vadd.f32 %v199, %v270
  %v272 = vpop.f32.mrb[0].mxu0
  %273 = vdwg.mxu0
  %v274 = vld [vmem:[#allocation3] sm:$0xff]
  %v275 = vld [vmem:[#allocation3 + $0x8] sm:$0xff]
  %v276 = vld [vmem:[#allocation3 + $0x10] sm:$0xff]
  %v277 = vld [vmem:[#allocation3 + $0x18] sm:$0xff]
  %v278 = vld [vmem:[#allocation3 + $0x20] sm:$0xff]
  %v279 = vld [vmem:[#allocation3 + $0x28] sm:$0xff]
  %v280 = vld [vmem:[#allocation3 + $0x30] sm:$0xff]
  %v281 = vld [vmem:[#allocation3 + $0x38] sm:$0xff]
  %v282 = vadd.f32 %v274, %v271
  %v283 = vadd.f32 %v275, %v271
  %v284 = vadd.f32 %v276, %v271
  %v285 = vadd.f32 %v277, %v271
  %v286 = vadd.f32 %v278, %v271
  %v287 = vadd.f32 %v279, %v271
  %v288 = vadd.f32 %v280, %v271
  %v289 = vadd.f32 %v281, %v271
  %v290 = vtanh.pop %v282
  %v291 = vtanh.pop %v283
  %v292 = vtanh.pop %v284
  %v293 = vtanh.pop %v285
  %v294 = vtanh.pop %v286
  %v295 = vtanh.pop %v287
  %v296 = vtanh.pop %v288
  %v297 = vtanh.pop %v289
  %v298 = vlaneseq
  %v299 = vshrl.u32 %v298, 7
  %v300 = vsub.s32 1, %v299
  %v301 = vrot.slane %v188, %v300
  %v302 = vmul.f32 %v290, %v301
  %v303 = vmul.f32 %v291, %v301
  %v304 = vmul.f32 %v292, %v301
  %v305 = vmul.f32 %v293, %v301
  %v306 = vmul.f32 %v294, %v301
  %v307 = vmul.f32 %v295, %v301
  %v308 = vmul.f32 %v296, %v301
  %v309 = vmul.f32 %v297, %v301
  %v310 = vsel %vm200, %v302, 0.0
  %311 = vadd.xlane.f32.xlu0 %v310
  %v312 = vpop.xlane.xlu0 %311
  %v313 = vsel %vm200, %v303, 0.0
  %314 = vadd.xlane.f32.xlu0 %v313
  %v315 = vpop.xlane.xlu0 %314
  %v316 = vsel %vm200, %v304, 0.0
  %317 = vadd.xlane.f32.xlu0 %v316
  %v318 = vpop.xlane.xlu0 %317
  %v319 = vsel %vm200, %v305, 0.0
  %320 = vadd.xlane.f32.xlu0 %v319
  %v321 = vpop.xlane.xlu0 %320
  %v322 = vsel %vm200, %v306, 0.0
  %323 = vadd.xlane.f32.xlu0 %v322
  %v324 = vpop.xlane.xlu0 %323
  %v325 = vsel %vm200, %v307, 0.0
  %326 = vadd.xlane.f32.xlu0 %v325
  %v327 = vpop.xlane.xlu0 %326
  %v328 = vsel %vm200, %v308, 0.0
  %329 = vadd.xlane.f32.xlu0 %v328
  %v330 = vpop.xlane.xlu0 %329
  %v331 = vsel %vm200, %v309, 0.0
  %332 = vadd.xlane.f32.xlu0 %v331
  %v333 = vpop.xlane.xlu0 %332
  %v334 = vmax.f32 %v312, %v324
  %v335 = vmax.f32 %v315, %v327
  %v336 = vmax.f32 %v318, %v330
  %v337 = vmax.f32 %v321, %v333
  %v338 = vmax.f32 %v334, %v335
  %v339 = vmax.f32 %v336, %v337
  %v340 = vmax.f32 %v338, %v339
  %v341 = vsub.f32 %v312, %v340
  %v342 = vsub.f32 %v315, %v340
  %v343 = vsub.f32 %v318, %v340
  %v344 = vsub.f32 %v321, %v340
  %v345 = vsub.f32 %v324, %v340
  %v346 = vsub.f32 %v327, %v340
  %v347 = vsub.f32 %v330, %v340
  %v348 = vsub.f32 %v333, %v340
  %v349 = vmul.f32 %v341, 1.442695
  %v350 = vpow.pop %v349
  %v351 = vmul.f32 %v342, 1.442695
  %v352 = vpow.pop %v351
  %v353 = vmul.f32 %v343, 1.442695
  %v354 = vpow.pop %v353
  %v355 = vmul.f32 %v344, 1.442695
  %v356 = vpow.pop %v355
  %v357 = vmul.f32 %v345, 1.442695
  %v358 = vpow.pop %v357
  %v359 = vmul.f32 %v346, 1.442695
  %v360 = vpow.pop %v359
  %v361 = vmul.f32 %v347, 1.442695
  %v362 = vpow.pop %v361
  %v363 = vmul.f32 %v348, 1.442695
  %v364 = vpow.pop %v363
  %v365 = vadd.f32 %v350, %v352
  %v366 = vadd.f32 %v365, %v354
  %v367 = vadd.f32 %v366, %v356
  %v368 = vadd.f32 %v367, %v358
  %v369 = vadd.f32 %v368, %v360
  %v370 = vadd.f32 %v369, %v362
  %v371 = vadd.f32 %v370, %v364
  %v372 = vrcp.pop %v371
  %v373 = vmul.f32 %v350, %v372
  %v374 = vmul.f32 %v352, %v372
  %v375 = vmul.f32 %v354, %v372
  %v376 = vmul.f32 %v356, %v372
  %v377 = vmul.f32 %v358, %v372
  %v378 = vmul.f32 %v360, %v372
  %v379 = vmul.f32 %v362, %v372
  %v380 = vmul.f32 %v364, %v372
  %v381 = vld [vmem:[%s2] sm:$0xff]
  %v382 = vld [vmem:[%s2 + $0x8] sm:$0xff]
  %v383 = vld [vmem:[%s2 + $0x10] sm:$0xff]
  %v384 = vld [vmem:[%s2 + $0x18] sm:$0xff]
  %v385 = vld [vmem:[%s2 + $0x20] sm:$0xff]
  %v386 = vld [vmem:[%s2 + $0x28] sm:$0xff]
  %v387 = vld [vmem:[%s2 + $0x30] sm:$0xff]
  %v388 = vld [vmem:[%s2 + $0x38] sm:$0xff]
  %v389 = vmul.f32 %v373, %v381
  %v390 = vmul.f32 %v374, %v382
  %v391 = vmul.f32 %v375, %v383
  %v392 = vmul.f32 %v376, %v384
  %v393 = vmul.f32 %v377, %v385
  %v394 = vmul.f32 %v378, %v386
  %v395 = vmul.f32 %v379, %v387
  %v396 = vmul.f32 %v380, %v388
  %v397 = vsel %vm200, %v389, 0.0
  %v398 = vsel %vm200, %v390, 0.0
  %v399 = vadd.f32 %v397, %v398
  %v400 = vsel %vm200, %v391, 0.0
  %v401 = vadd.f32 %v399, %v400
  %v402 = vsel %vm200, %v392, 0.0
  %v403 = vadd.f32 %v401, %v402
  %v404 = vsel %vm200, %v393, 0.0
  %v405 = vadd.f32 %v403, %v404
  %v406 = vsel %vm200, %v394, 0.0
  %v407 = vadd.f32 %v405, %v406
  %v408 = vsel %vm200, %v395, 0.0
  %v409 = vadd.f32 %v407, %v408
  %v410 = vsel %vm200, %v396, 0.0
  %v411 = vadd.f32 %v409, %v410
  %v412 = vld [vmem:[%s4 + $0x40] sm:$0xff]
  %v413 = vld [vmem:[%s4] sm:$0xff]
  %v414 = vld [vmem:[%s4 + $0x8] sm:$0xff]
  %v415 = vld [vmem:[%s4 + $0x10] sm:$0xff]
  %v416 = vld [vmem:[%s4 + $0x18] sm:$0xff]
  %v417 = vld [vmem:[%s4 + $0x20] sm:$0xff]
  %v418 = vld [vmem:[%s4 + $0x28] sm:$0xff]
  %v419 = vld [vmem:[%s4 + $0x30] sm:$0xff]
  %v420 = vld [vmem:[%s4 + $0x38] sm:$0xff]
  %v422 = vsel %vm200, %v192, 0
  %424 = vmatprep.subr.mxu0 0.0
  %425 = vmatpush1.msra.mxu0 %v417
  %426 = vmatprep.subr.mxu0 0.0
  %427 = vmatpush1.msra.mxu0 %v418
  %428 = vmatprep.subr.mxu0 0.0
  %429 = vmatpush1.msra.mxu0 %v419
  %430 = vmatprep.subr.mxu0 0.0
  %431 = vmatpush1.msra.mxu0 %v420
  %432 = vmatprep.subr.mxu0 0.0
  %433 = vmatpush1.msra.mxu0 0.0
  %434 = vmatprep.subr.mxu0 0.0
  %435 = vmatpush1.msra.mxu0 0.0
  %436 = vmatprep.subr.mxu0 0.0
  %437 = vmatpush1.msra.mxu0 0.0
  %438 = vmatprep.subr.mxu0 0.0
  %439 = vmatpush1.msra.mxu0 0.0
  %440 = vmatprep.subr.mxu0 0.0
  %441 = vmatpush1.msra.mxu0 0.0
  %442 = vmatprep.subr.mxu0 0.0
  %443 = vmatpush1.msra.mxu0 0.0
  %444 = vmatprep.subr.mxu0 0.0
  %445 = vmatpush1.msra.mxu0 0.0
  %446 = vmatprep.subr.mxu0 0.0
  %447 = vmatpush1.msra.mxu0 0.0
  %448 = vmatprep.subr.mxu0 0.0
  %449 = vmatpush1.msra.mxu0 0.0
  %450 = vmatprep.subr.mxu0 0.0
  %451 = vmatpush1.msra.mxu0 0.0
  %452 = vmatprep.subr.mxu0 0.0
  %453 = vmatpush1.msra.mxu0 0.0
  %454 = vmatprep.subr.mxu0 0.0
  %455 = vmatpush1.msra.mxu0 0.0
  %456 = vmatprep.subr.mxu0 0.0
  %457 = vmatpush1.msra.mxu0 0.0
  %458 = vmatprep.subr.mxu0 0.0
  %459 = vmatpush1.msra.mxu0 0.0
  %460 = vmatprep.subr.mxu0 0.0
  %461 = vmatpush1.msra.mxu0 0.0
  %462 = vmatprep.subr.mxu0 0.0
  %463 = vmatpush1.msra.mxu0 0.0
  %464 = vmatprep.subr.mxu0 0.0
  %465 = vmatpush1.msra.mxu0 0.0
  %466 = vmatprep.subr.mxu0 0.0
  %467 = vmatpush1.msra.mxu0 0.0
  %468 = vmatprep.subr.mxu0 0.0
  %469 = vmatpush1.msra.mxu0 0.0
  %470 = vmatprep.subr.mxu0 0.0
  %471 = vmatpush1.msra.mxu0 0.0
  %472 = vmatprep.subr.mxu0 0.0
  %473 = vmatpush1.msra.mxu0 0.0
  %474 = vmatprep.subr.mxu0 0.0
  %475 = vmatpush1.msra.mxu0 0.0
  %476 = vmatprep.subr.mxu0 0.0
  %477 = vmatpush1.msra.mxu0 0.0
  %478 = vmatprep.subr.mxu0 0.0
  %479 = vmatpush1.msra.mxu0 0.0
  %480 = vmatprep.subr.mxu0 0.0
  %481 = vmatpush1.msra.mxu0 0.0
  %482 = vmatprep.subr.mxu0 0.0
  %483 = vmatpush1.msra.mxu0 0.0
  %484 = vmatprep.subr.mxu0 0.0
  %485 = vmatpush1.msra.mxu0 0.0
  %486 = vmatprep.subr.mxu0 0.0
  %487 = vmatpush1.msra.mxu0 0.0
  %488 = vmatprep.mubr.f32.mxu0 0.0
  %489 = vmatmul.mubr.f32.gmra.mrb[0].mxu0 %v422
  %v490 = vpop.f32.mrb[0].mxu0
  %v491 = vadd.f32 0.0, %v490
  %v492 = vpop.f32.mrb[0].mxu0
  %493 = vdwg.mxu0
  %v495 = vsel %vm200, %v411, 0
  %497 = vmatprep.subr.mxu0 0.0
  %498 = vmatpush1.msra.mxu0 %v413
  %499 = vmatprep.subr.mxu0 0.0
  %500 = vmatpush1.msra.mxu0 %v414
  %501 = vmatprep.subr.mxu0 0.0
  %502 = vmatpush1.msra.mxu0 %v415
  %503 = vmatprep.subr.mxu0 0.0
  %504 = vmatpush1.msra.mxu0 %v416
  %505 = vmatprep.subr.mxu0 0.0
  %506 = vmatpush1.msra.mxu0 0.0
  %507 = vmatprep.subr.mxu0 0.0
  %508 = vmatpush1.msra.mxu0 0.0
  %509 = vmatprep.subr.mxu0 0.0
  %510 = vmatpush1.msra.mxu0 0.0
  %511 = vmatprep.subr.mxu0 0.0
  %512 = vmatpush1.msra.mxu0 0.0
  %513 = vmatprep.subr.mxu0 0.0
  %514 = vmatpush1.msra.mxu0 0.0
  %515 = vmatprep.subr.mxu0 0.0
  %516 = vmatpush1.msra.mxu0 0.0
  %517 = vmatprep.subr.mxu0 0.0
  %518 = vmatpush1.msra.mxu0 0.0
  %519 = vmatprep.subr.mxu0 0.0
  %520 = vmatpush1.msra.mxu0 0.0
  %521 = vmatprep.subr.mxu0 0.0
  %522 = vmatpush1.msra.mxu0 0.0
  %523 = vmatprep.subr.mxu0 0.0
  %524 = vmatpush1.msra.mxu0 0.0
  %525 = vmatprep.subr.mxu0 0.0
  %526 = vmatpush1.msra.mxu0 0.0
  %527 = vmatprep.subr.mxu0 0.0
  %528 = vmatpush1.msra.mxu0 0.0
  %529 = vmatprep.subr.mxu0 0.0
  %530 = vmatpush1.msra.mxu0 0.0
  %531 = vmatprep.subr.mxu0 0.0
  %532 = vmatpush1.msra.mxu0 0.0
  %533 = vmatprep.subr.mxu0 0.0
  %534 = vmatpush1.msra.mxu0 0.0
  %535 = vmatprep.subr.mxu0 0.0
  %536 = vmatpush1.msra.mxu0 0.0
  %537 = vmatprep.subr.mxu0 0.0
  %538 = vmatpush1.msra.mxu0 0.0
  %539 = vmatprep.subr.mxu0 0.0
  %540 = vmatpush1.msra.mxu0 0.0
  %541 = vmatprep.subr.mxu0 0.0
  %542 = vmatpush1.msra.mxu0 0.0
  %543 = vmatprep.subr.mxu0 0.0
  %544 = vmatpush1.msra.mxu0 0.0
  %545 = vmatprep.subr.mxu0 0.0
  %546 = vmatpush1.msra.mxu0 0.0
  %547 = vmatprep.subr.mxu0 0.0
  %548 = vmatpush1.msra.mxu0 0.0
  %549 = vmatprep.subr.mxu0 0.0
  %550 = vmatpush1.msra.mxu0 0.0
  %551 = vmatprep.subr.mxu0 0.0
  %552 = vmatpush1.msra.mxu0 0.0
  %553 = vmatprep.subr.mxu0 0.0
  %554 = vmatpush1.msra.mxu0 0.0
  %555 = vmatprep.subr.mxu0 0.0
  %556 = vmatpush1.msra.mxu0 0.0
  %557 = vmatprep.subr.mxu0 0.0
  %558 = vmatpush1.msra.mxu0 0.0
  %559 = vmatprep.subr.mxu0 0.0
  %560 = vmatpush1.msra.mxu0 0.0
  %561 = vmatprep.mubr.f32.mxu0 0.0
  %562 = vmatmul.mubr.f32.gmra.mrb[0].mxu0 %v495
  %v563 = vpop.f32.mrb[0].mxu0
  %v564 = vadd.f32 %v491, %v563
  %v565 = vpop.f32.mrb[0].mxu0
  %566 = vdwg.mxu0
  %568 = vset.pattern.permute.xlu0 0
  %569 = vperm.xlu0 %568, %v190
  %v570 = vpop.permute.xlu0 %569
  %v572 = vlaneseq
  %v573 = vshrl.u32 %v572, 7
  %v574 = vsub.s32 1, %v573
  %v575 = vrot.slane %v412, %v574
  %v576 = vmul.f32 %v570, %v575
  %v577 = vadd.f32 %v564, %v576
  %v578 = vlaneseq
  %v579 = vshrl.u32 %v578, 7
  %v580 = vsub.s32 0, %v579
  %v581 = vrot.slane %v412, %v580
  %v582 = vadd.f32 %v577, %v581
  %v583 = vxor.u32 %v582, 2147483648
  %v584 = vmul.f32 %v583, 1.442695
  %v585 = vpow.pop %v584
  %v586 = vadd.f32 %v585, 1.0
  %v587 = vrcp.pop %v586
  %v588 = vmul.f32 1.0, %v587
  %v589 = vtanh.pop %v582
  %591 = vrot.lane.b32.xlu0 %v194, 32
  %v592 = vpop.permute.xlu0 %591
  %v594 = vmul.f32 %v588, %v592
  %596 = vrot.lane.b32.xlu0 %v589, 64
  %v597 = vpop.permute.xlu0 %596
  %v599 = vmul.f32 %v588, %v597
  %601 = vrot.lane.b32.xlu0 %v599, 32
  %v602 = vpop.permute.xlu0 %601
  %v604 = vadd.f32 %v594, %v602
  %v605 = vtanh.pop %v604
  %607 = vrot.lane.b32.xlu0 %v605, 64
  %v608 = vpop.permute.xlu0 %607
  %v610 = vmul.f32 %v588, %v608
  %v611 = vld [vmem:[%s4 + $0x48] sm:$0xff]
  %v612 = vld [vmem:[%s4 + $0x50] sm:$0xff]
  %v613 = vld [vmem:[%s4 + $0x58] sm:$0xff]
  %v614 = vld [vmem:[%s4 + $0x60] sm:$0xff]
  %v615 = vld [vmem:[%s4 + $0x68] sm:$0xff]
  %v616 = vld [vmem:[%s4 + $0x70] sm:$0xff]
  %v617 = vld [vmem:[%s4 + $0x78] sm:$0xff]
  %v618 = vld [vmem:[%s4 + $0x80] sm:$0xff]
  %v620 = vsel %vm200, %v193, 0
  %622 = vmatprep.subr.mxu0 0.0
  %623 = vmatpush1.msra.mxu0 %v615
  %624 = vmatprep.subr.mxu0 0.0
  %625 = vmatpush1.msra.mxu0 %v616
  %626 = vmatprep.subr.mxu0 0.0
  %627 = vmatpush1.msra.mxu0 %v617
  %628 = vmatprep.subr.mxu0 0.0
  %629 = vmatpush1.msra.mxu0 %v618
  %630 = vmatprep.subr.mxu0 0.0
  %631 = vmatpush1.msra.mxu0 0.0
  %632 = vmatprep.subr.mxu0 0.0
  %633 = vmatpush1.msra.mxu0 0.0
  %634 = vmatprep.subr.mxu0 0.0
  %635 = vmatpush1.msra.mxu0 0.0
  %636 = vmatprep.subr.mxu0 0.0
  %637 = vmatpush1.msra.mxu0 0.0
  %638 = vmatprep.subr.mxu0 0.0
  %639 = vmatpush1.msra.mxu0 0.0
  %640 = vmatprep.subr.mxu0 0.0
  %641 = vmatpush1.msra.mxu0 0.0
  %642 = vmatprep.subr.mxu0 0.0
  %643 = vmatpush1.msra.mxu0 0.0
  %644 = vmatprep.subr.mxu0 0.0
  %645 = vmatpush1.msra.mxu0 0.0
  %646 = vmatprep.subr.mxu0 0.0
  %647 = vmatpush1.msra.mxu0 0.0
  %648 = vmatprep.subr.mxu0 0.0
  %649 = vmatpush1.msra.mxu0 0.0
  %650 = vmatprep.subr.mxu0 0.0
  %651 = vmatpush1.msra.mxu0 0.0
  %652 = vmatprep.subr.mxu0 0.0
  %653 = vmatpush1.msra.mxu0 0.0
  %654 = vmatprep.subr.mxu0 0.0
  %655 = vmatpush1.msra.mxu0 0.0
  %656 = vmatprep.subr.mxu0 0.0
  %657 = vmatpush1.msra.mxu0 0.0
  %658 = vmatprep.subr.mxu0 0.0
  %659 = vmatpush1.msra.mxu0 0.0
  %660 = vmatprep.subr.mxu0 0.0
  %661 = vmatpush1.msra.mxu0 0.0
  %662 = vmatprep.subr.mxu0 0.0
  %663 = vmatpush1.msra.mxu0 0.0
  %664 = vmatprep.subr.mxu0 0.0
  %665 = vmatpush1.msra.mxu0 0.0
  %666 = vmatprep.subr.mxu0 0.0
  %667 = vmatpush1.msra.mxu0 0.0
  %668 = vmatprep.subr.mxu0 0.0
  %669 = vmatpush1.msra.mxu0 0.0
  %670 = vmatprep.subr.mxu0 0.0
  %671 = vmatpush1.msra.mxu0 0.0
  %672 = vmatprep.subr.mxu0 0.0
  %673 = vmatpush1.msra.mxu0 0.0
  %674 = vmatprep.subr.mxu0 0.0
  %675 = vmatpush1.msra.mxu0 0.0
  %676 = vmatprep.subr.mxu0 0.0
  %677 = vmatpush1.msra.mxu0 0.0
  %678 = vmatprep.subr.mxu0 0.0
  %679 = vmatpush1.msra.mxu0 0.0
  %680 = vmatprep.subr.mxu0 0.0
  %681 = vmatpush1.msra.mxu0 0.0
  %682 = vmatprep.subr.mxu0 0.0
  %683 = vmatpush1.msra.mxu0 0.0
  %684 = vmatprep.subr.mxu0 0.0
  %685 = vmatpush1.msra.mxu0 0.0
  %686 = vmatprep.mubr.f32.mxu0 0.0
  %687 = vmatmul.mubr.f32.gmra.mrb[0].mxu0 %v620
  %v688 = vpop.f32.mrb[0].mxu0
  %v689 = vadd.f32 0.0, %v688
  %v690 = vpop.f32.mrb[0].mxu0
  %691 = vdwg.mxu0
  %693 = vrot.lane.b32.xlu0 %v610, 32
  %v694 = vpop.permute.xlu0 %693
  %v695 = vsel %vm200, %v694, 0
  %697 = vmatprep.subr.mxu0 0.0
  %698 = vmatpush1.msra.mxu0 %v611
  %699 = vmatprep.subr.mxu0 0.0
  %700 = vmatpush1.msra.mxu0 %v612
  %701 = vmatprep.subr.mxu0 0.0
  %702 = vmatpush1.msra.mxu0 %v613
  %703 = vmatprep.subr.mxu0 0.0
  %704 = vmatpush1.msra.mxu0 %v614
  %705 = vmatprep.subr.mxu0 0.0
  %706 = vmatpush1.msra.mxu0 0.0
  %707 = vmatprep.subr.mxu0 0.0
  %708 = vmatpush1.msra.mxu0 0.0
  %709 = vmatprep.subr.mxu0 0.0
  %710 = vmatpush1.msra.mxu0 0.0
  %711 = vmatprep.subr.mxu0 0.0
  %712 = vmatpush1.msra.mxu0 0.0
  %713 = vmatprep.subr.mxu0 0.0
  %714 = vmatpush1.msra.mxu0 0.0
  %715 = vmatprep.subr.mxu0 0.0
  %716 = vmatpush1.msra.mxu0 0.0
  %717 = vmatprep.subr.mxu0 0.0
  %718 = vmatpush1.msra.mxu0 0.0
  %719 = vmatprep.subr.mxu0 0.0
  %720 = vmatpush1.msra.mxu0 0.0
  %721 = vmatprep.subr.mxu0 0.0
  %722 = vmatpush1.msra.mxu0 0.0
  %723 = vmatprep.subr.mxu0 0.0
  %724 = vmatpush1.msra.mxu0 0.0
  %725 = vmatprep.subr.mxu0 0.0
  %726 = vmatpush1.msra.mxu0 0.0
  %727 = vmatprep.subr.mxu0 0.0
  %728 = vmatpush1.msra.mxu0 0.0
  %729 = vmatprep.subr.mxu0 0.0
  %730 = vmatpush1.msra.mxu0 0.0
  %731 = vmatprep.subr.mxu0 0.0
  %732 = vmatpush1.msra.mxu0 0.0
  %733 = vmatprep.subr.mxu0 0.0
  %734 = vmatpush1.msra.mxu0 0.0
  %735 = vmatprep.subr.mxu0 0.0
  %736 = vmatpush1.msra.mxu0 0.0
  %737 = vmatprep.subr.mxu0 0.0
  %738 = vmatpush1.msra.mxu0 0.0
  %739 = vmatprep.subr.mxu0 0.0
  %740 = vmatpush1.msra.mxu0 0.0
  %741 = vmatprep.subr.mxu0 0.0
  %742 = vmatpush1.msra.mxu0 0.0
  %743 = vmatprep.subr.mxu0 0.0
  %744 = vmatpush1.msra.mxu0 0.0
  %745 = vmatprep.subr.mxu0 0.0
  %746 = vmatpush1.msra.mxu0 0.0
  %747 = vmatprep.subr.mxu0 0.0
  %748 = vmatpush1.msra.mxu0 0.0
  %749 = vmatprep.subr.mxu0 0.0
  %750 = vmatpush1.msra.mxu0 0.0
  %751 = vmatprep.subr.mxu0 0.0
  %752 = vmatpush1.msra.mxu0 0.0
  %753 = vmatprep.subr.mxu0 0.0
  %754 = vmatpush1.msra.mxu0 0.0
  %755 = vmatprep.subr.mxu0 0.0
  %756 = vmatpush1.msra.mxu0 0.0
  %757 = vmatprep.subr.mxu0 0.0
  %758 = vmatpush1.msra.mxu0 0.0
  %759 = vmatprep.subr.mxu0 0.0
  %760 = vmatpush1.msra.mxu0 0.0
  %761 = vmatprep.mubr.f32.mxu0 0.0
  %762 = vmatmul.mubr.f32.gmra.mrb[0].mxu0 %v695
  %v763 = vpop.f32.mrb[0].mxu0
  %v764 = vadd.f32 %v689, %v763
  %v765 = vpop.f32.mrb[0].mxu0
  %766 = vdwg.mxu0
  %v767 = vld [vmem:[%s4 + $0x88] sm:$0x1]
  %v768 = vlaneseq
  %v769 = vshrl.u32 %v768, 7
  %v770 = vsub.s32 0, %v769
  %v771 = vrot.slane %v767, %v770
  %v772 = vadd.f32 %v764, %v771
  %v773 = vxor.u32 %v772, 2147483648
  %v774 = vmul.f32 %v773, 1.442695
  %v775 = vpow.pop %v774
  %v776 = vadd.f32 %v775, 1.0
  %v777 = vrcp.pop %v776
  %v778 = vmul.f32 1.0, %v777
  %v779 = vtanh.pop %v772
  %781 = vrot.lane.b32.xlu0 %v195, 32
  %v782 = vpop.permute.xlu0 %781
  %v784 = vmul.f32 %v778, %v782
  %786 = vrot.lane.b32.xlu0 %v779, 64
  %v787 = vpop.permute.xlu0 %786
  %v789 = vmul.f32 %v778, %v787
  %791 = vrot.lane.b32.xlu0 %v789, 32
  %v792 = vpop.permute.xlu0 %791
  %v794 = vadd.f32 %v784, %v792
  %v795 = vtanh.pop %v794
  %797 = vrot.lane.b32.xlu0 %v795, 64
  %v798 = vpop.permute.xlu0 %797
  %v800 = vmul.f32 %v778, %v798
  %v801 = vlaneseq
  %v802 = vshrl.u32 %v801, 7
  %v803 = vsub.s32 0, %v802
  %v804 = vrot.slane %v189, %v803
  %v805 = vmul.f32 %v411, %v804
  %v806 = vsel %vm200, %v805, 0.0
  %807 = vadd.xlane.f32.xlu0 %v806
  %v808 = vpop.xlane.xlu0 %807
  %v809 = vlaneseq
  %v810 = vshrl.u32 %v809, 7
  %v811 = vsub.s32 1, %v810
  %v812 = vrot.slane %v189, %v811
  %814 = vrot.lane.b32.xlu0 %v812, 96
  %v815 = vpop.permute.xlu0 %814
  %v817 = vmul.f32 %v800, %v815
  %819 = vrot.lane.b32.xlu0 %v817, 32
  %v820 = vpop.permute.xlu0 %819
  %v822 = vsel %vm200, %v820, 0.0
  %823 = vadd.xlane.f32.xlu0 %v822
  %v824 = vpop.xlane.xlu0 %823
  %v825 = vadd.f32 %v808, %v824
  %v826 = vlaneseq
  %v827 = vshrl.u32 %v826, 7
  %v828 = vsub.s32 2, %v827
  %v829 = vrot.slane %v189, %v828
  %v830 = vmul.f32 %v190, %v829
  %v831 = vadd.f32 %v825, %v830
  %833 = vrot.lane.b32.xlu0 %v829, 127
  %v834 = vpop.permute.xlu0 %833
  %v836 = vadd.f32 %v831, %v834
  %838 = vrot.lane.b32.xlu0 %v800, 32
  %v839 = vpop.permute.xlu0 %838
  %841 = vst.msk [vmem:[#allocation2] sm:$0xff] %vm200, %v839
  %843 = vst.msk [vmem:[#allocation2 + $0x8] sm:$0xff] %vm200, %v694
  %844 = vst.msk [vmem:[#allocation2 + $0x10] sm:$0xff] %vm200, %v839
  %846 = vrot.lane.b32.xlu0 %v604, 96
  %v847 = vpop.permute.xlu0 %846
  %849 = vst.msk [vmem:[#allocation2 + $0x18] sm:$0xff] %vm200, %v847
  %851 = vrot.lane.b32.xlu0 %v794, 96
  %v852 = vpop.permute.xlu0 %851
  %854 = vst.msk [vmem:[#allocation2 + $0x20] sm:$0xff] %vm200, %v852
  %855 = vst.msk [vmem:[%s5] sm:$0xff] %vm200, %v839
  %856 = vrot.lane.b32.xlu0 %v610, 64
  %v857 = vpop.permute.xlu0 %856
  %vm859 = vcmask 523520
  %860 = vst.msk [vmem:[%s5] sm:$0xff] %vm859, %v857
  %861 = vrot.lane.b32.xlu0 %v604, 32
  %v862 = vpop.permute.xlu0 %861
  %vm864 = vcmask 785920
  %865 = vst.msk [vmem:[%s5] sm:$0xff] %vm864, %v862
  %866 = vrot.lane.b32.xlu0 %v794, 64
  %v867 = vpop.permute.xlu0 %866
  %vm869 = vcmask 1048320
  %870 = vst.msk [vmem:[%s5] sm:$0xff] %vm869, %v867
  %872 = vset.pattern.permute.xlu0 0
  %873 = vperm.xlu0 %872, %v836
  %v874 = vpop.permute.xlu0 %873
  %vm876 = vcmask 64512
  %877 = vst.msk [vmem:[%s5 + $0x8] sm:$0xff] %vm876, %v874
  // Predicated region
  $region26: #{decoder_forward.1} parent=0 // pred_check
    _
  $region27: #{decoder_forward.1} parent=0 // pred_check_branch
    %879 = sbr.rel (0) target = $region29
  $region28: #{decoder_forward.1} parent=0 // pred_region
    _
  $region29: #{decoder_forward.1} parent=0 // pred_fallthru
    _
  // Predicated region
  $region30: #{decoder_forward.1} parent=0 // pred_check
    _
  $region31: #{decoder_forward.1} parent=0 // pred_check_branch
    %881 = sbr.rel (0) target = $region33
  $region32: #{decoder_forward.1} parent=0 // pred_region
    _
  $region33: #{decoder_forward.1} parent=0 // pred_fallthru
    _

</llo_original>
